<compile_context>
chip_gen: v5e
topology: v5e:2x2
jax: 0.10.0
libtpu: 0.0.40
codegen_flags: <defaults>
</compile_context>

<pallas_src>
import functools

import jax
import jax.numpy as jnp
from jax.experimental import pallas as pl
from jax.experimental.pallas import tpu as pltpu


def _feature_resizer_kernel(x_ref, w_ref, p_ref, o_ref, *, do_ln, eps, c2_true):
    # x_ref: (TM, C1p)  w_ref: (C1p, C2p)  p_ref: (3, C2p) = [bias; gamma; beta]
    # o_ref: (TM, C2p)
    y = jnp.dot(x_ref[...], w_ref[...], preferred_element_type=jnp.float32)

    params = p_ref[...].astype(jnp.float32)
    bias = params[0:1, :]
    y = y + bias  # padded bias columns are zero -> padded y columns stay zero

    if do_ln:
        gamma = params[1:2, :]
        beta = params[2:3, :]
        c2p = y.shape[-1]
        if c2p == c2_true:
            mean = jnp.mean(y, axis=-1, keepdims=True)
            centered = y - mean
            var = jnp.mean(centered * centered, axis=-1, keepdims=True)
        else:
            # Lane-padded feature dim: mask the padded columns out of the LN
            # statistics and normalize by the true feature count.
            col = jax.lax.broadcasted_iota(jnp.int32, y.shape, 1)
            mask = (col < c2_true).astype(jnp.float32)
            inv_n = jnp.float32(1.0 / c2_true)
            mean = jnp.sum(y * mask, axis=-1, keepdims=True) * inv_n
            centered = (y - mean) * mask
            var = jnp.sum(centered * centered, axis=-1, keepdims=True) * inv_n
        y = centered * jax.lax.rsqrt(var + eps)
        # padded gamma/beta columns are zero -> padded output columns are zero
        y = y * gamma + beta

    # TODO(synk): dropout is identity here (inference/eval semantics); training-mode
    # dropout would need pltpu.prng_seed / prng_random_bits masking.
    o_ref[...] = y.astype(o_ref.dtype)


def _round_up(v, m):
    return (v + m - 1) // m * m


def feature_resizer(x, w, b, gamma=None, beta=None, *, do_ln=True, eps=1e-12, tm=256):
    """x: (B, L, C1) -> (B, L, C2).  Weights follow nn.Linear(C1, C2) layout (C1, C2)."""
    B, L, C1 = x.shape
    C1w, C2 = w.shape
    assert C1w == C1, "weight shape must be (C1, C2)"
    N = B * L

    # Lane-dense feature dims (multiples of 128) and a big, 8-aligned row tile.
    C1p = _round_up(C1, 128)
    C2p = _round_up(C2, 128)
    tm = max(8, (tm // 8) * 8)
    tm_eff = min(tm, _round_up(N, 8))        # don't over-tile tiny inputs
    Np = _round_up(N, tm_eff)                # pad rows instead of asserting N % tm == 0

    # --- wrapper-side padding (all zero padding; sliced off after the kernel) ---
    x2 = x.reshape(N, C1)
    if (Np != N) or (C1p != C1):
        x2 = jnp.pad(x2, ((0, Np - N), (0, C1p - C1)))
    if (C1p != C1) or (C2p != C2):
        wp = jnp.pad(w, ((0, C1p - C1), (0, C2p - C2)))
    else:
        wp = w

    if gamma is None:
        gamma = jnp.ones((C2,), w.dtype)
    if beta is None:
        beta = jnp.zeros((C2,), w.dtype)
    params = jnp.stack([b, gamma, beta], axis=0)     # (3, C2): one resident DMA
    if C2p != C2:
        params = jnp.pad(params, ((0, 0), (0, C2p - C2)))

    # --- VMEM budget: double-buffered x + out tiles, resident W and params ---
    x_item = jnp.dtype(x.dtype).itemsize
    w_item = jnp.dtype(wp.dtype).itemsize
    est = (2 * tm_eff * C1p * x_item          # x double buffer
           + 2 * tm_eff * C2p * x_item        # out double buffer
           + C1p * C2p * w_item               # resident W
           + 3 * C2p * w_item                 # resident bias/gamma/beta
           + tm_eff * C2p * 4)                # f32 intermediates headroom
    vmem_limit = int(min(max(2 * est + (4 << 20), 32 << 20), 64 << 20))

    kernel = functools.partial(_feature_resizer_kernel,
                               do_ln=do_ln, eps=eps, c2_true=C2)

    out2 = pl.pallas_call(
        kernel,
        out_shape=jax.ShapeDtypeStruct((Np, C2p), x.dtype),
        grid_spec=pltpu.PrefetchScalarGridSpec(
            num_scalar_prefetch=0,
            grid=(Np // tm_eff,),
            in_specs=[
                pl.BlockSpec((tm_eff, C1p), lambda i: (i, 0)),  # streaming x row tile
                pl.BlockSpec((C1p, C2p), lambda i: (0, 0)),     # W (VMEM resident)
                pl.BlockSpec((3, C2p), lambda i: (0, 0)),       # [b; gamma; beta]
            ],
            out_specs=pl.BlockSpec((tm_eff, C2p), lambda i: (i, 0)),
        ),
        compiler_params=pltpu.CompilerParams(
            dimension_semantics=("parallel",),
            vmem_limit_bytes=vmem_limit),
    )(x2, wp, params)

    out2 = out2[:N, :C2]
    return out2.reshape(B, L, C2)


def _reference(x, w, b, gamma, beta, do_ln=True, eps=1e-12):
    y = jnp.einsum("blc,cd->bld", x, w) + b
    if not do_ln:
        return y
    mean = jnp.mean(y, axis=-1, keepdims=True)
    var = jnp.mean((y - mean) ** 2, axis=-1, keepdims=True)
    return (y - mean) / jnp.sqrt(var + eps) * gamma + beta


if __name__ == "__main__":
    key = jax.random.PRNGKey(0)
    B, L = 2, 8          # batch of 2 sequences, 8 tokens each
    C1, C2 = 32, 64      # input_feat_size -> output_feat_size

    k_x, k_w, k_b, k_g, k_be = jax.random.split(key, 5)
    x = jax.random.normal(k_x, (B, L, C1), dtype=jnp.float32)

    # Deterministic parameter init (shapes follow nn.Linear(C1, C2) + nn.LayerNorm(C2)).
    bound = 1.0 / jnp.sqrt(jnp.float32(C1))
    w = jax.random.uniform(k_w, (C1, C2), jnp.float32, -bound, bound)
    b = jax.random.uniform(k_b, (C2,), jnp.float32, -bound, bound)
    gamma = 1.0 + 0.1 * jax.random.normal(k_g, (C2,), dtype=jnp.float32)
    beta = 0.1 * jax.random.normal(k_be, (C2,), dtype=jnp.float32)

    # do_ln=True path
    out = feature_resizer(x, w, b, gamma, beta, do_ln=True)
    out = jax.block_until_ready(out)
    ref = _reference(x, w, b, gamma, beta, do_ln=True)
    assert out.shape == (B, L, C2)
    assert jnp.allclose(out, ref, atol=1e-4, rtol=1e-4), "mismatch vs reference (do_ln=True)"

    # do_ln=False path (same kernel, compile-time switch)
    out_nl = feature_resizer(x, w, b, gamma, beta, do_ln=False)
    out_nl = jax.block_until_ready(out_nl)
    ref_nl = _reference(x, w, b, gamma, beta, do_ln=False)
    assert jnp.allclose(out_nl, ref_nl, atol=1e-4, rtol=1e-4), "mismatch vs reference (do_ln=False)"

    print("KERNEL_OK")
</pallas_src>

<mosaic_0001>
module attributes {stable_mosaic.version = 11 : i64} {
  func.func @_feature_resizer_kernel(%arg0: i32, %arg1: memref<16x128xf32, #tpu.memory_space<vmem>>, %arg2: memref<128x128xf32, #tpu.memory_space<vmem>>, %arg3: memref<3x128xf32, #tpu.memory_space<vmem>>, %arg4: memref<16x128xf32, #tpu.memory_space<vmem>>) attributes {dimension_semantics = [#tpu.dimension_semantics<parallel>], iteration_bounds = array<i64: 1>, scalar_prefetch = 0 : i64, scratch_operands = 0 : i64, tpu.core_type = #tpu.core_type<tc>, window_params = [{transform_indices = @transform_0, window_bounds = array<i64: 16, 128>}, {pipeline_mode = #tpu.pipeline_mode<synchronous>, transform_indices = @transform_1, window_bounds = array<i64: 128, 128>}, {pipeline_mode = #tpu.pipeline_mode<synchronous>, transform_indices = @transform_2, window_bounds = array<i64: 3, 128>}, {transform_indices = @transform_3, window_bounds = array<i64: 16, 128>}]} {
    %c0 = arith.constant 0 : index
    %c0_0 = arith.constant 0 : index
    %0 = vector.load %arg1[%c0, %c0_0] : memref<16x128xf32, #tpu.memory_space<vmem>>, vector<16x128xf32>
    %c0_1 = arith.constant 0 : index
    %c0_2 = arith.constant 0 : index
    %1 = vector.load %arg2[%c0_1, %c0_2] : memref<128x128xf32, #tpu.memory_space<vmem>>, vector<128x128xf32>
    %cst = arith.constant dense<0.000000e+00> : vector<16x128xf32>
    %2 = tpu.matmul %0, %1, %cst {dimension_numbers = #tpu.dot_dimension_numbers<[1], [0], [0], [1], [0, 0, 1, 1], [], []>} : vector<16x128xf32>, vector<128x128xf32>, vector<16x128xf32> -> vector<16x128xf32>
    %c0_3 = arith.constant 0 : index
    %c0_4 = arith.constant 0 : index
    %3 = vector.load %arg3[%c0_3, %c0_4] : memref<3x128xf32, #tpu.memory_space<vmem>>, vector<3x128xf32>
    %4 = vector.extract_strided_slice %3 {offsets = [0, 0], sizes = [1, 128], strides = [1, 1]} : vector<3x128xf32> to vector<1x128xf32>
    %5 = vector.broadcast %4 : vector<1x128xf32> to vector<16x128xf32>
    %6 = arith.addf %2, %5 : vector<16x128xf32>
    %7 = vector.extract_strided_slice %3 {offsets = [1, 0], sizes = [1, 128], strides = [1, 1]} : vector<3x128xf32> to vector<1x128xf32>
    %8 = vector.extract_strided_slice %3 {offsets = [2, 0], sizes = [1, 128], strides = [1, 1]} : vector<3x128xf32> to vector<1x128xf32>
    %9 = tpu.iota {dimensions = array<i32: 1>} : vector<16x128xi32>
    %c64_i32 = arith.constant 64 : i32
    %10 = vector.broadcast %c64_i32 : i32 to vector<16x128xi32>
    %11 = arith.cmpi slt, %9, %10 : vector<16x128xi32>
    %12 = arith.extui %11 : vector<16x128xi1> to vector<16x128xi32>
    %13 = arith.sitofp %12 : vector<16x128xi32> to vector<16x128xf32>
    %14 = arith.mulf %6, %13 : vector<16x128xf32>
    %cst_5 = arith.constant dense<0.000000e+00> : vector<16xf32>
    %15 = vector.multi_reduction <add>, %14, %cst_5 [1] : vector<16x128xf32> to vector<16xf32>
    %16 = vector.shape_cast %15 : vector<16xf32> to vector<16x1xf32>
    %cst_6 = arith.constant 1.562500e-02 : f32
    %17 = vector.broadcast %cst_6 : f32 to vector<16x1xf32>
    %18 = arith.mulf %16, %17 : vector<16x1xf32>
    %19 = vector.broadcast %18 : vector<16x1xf32> to vector<16x128xf32>
    %20 = arith.subf %6, %19 : vector<16x128xf32>
    %21 = arith.mulf %20, %13 : vector<16x128xf32>
    %22 = arith.mulf %21, %21 : vector<16x128xf32>
    %cst_7 = arith.constant dense<0.000000e+00> : vector<16xf32>
    %23 = vector.multi_reduction <add>, %22, %cst_7 [1] : vector<16x128xf32> to vector<16xf32>
    %24 = vector.shape_cast %23 : vector<16xf32> to vector<16x1xf32>
    %cst_8 = arith.constant 1.562500e-02 : f32
    %25 = vector.broadcast %cst_8 : f32 to vector<16x1xf32>
    %26 = arith.mulf %24, %25 : vector<16x1xf32>
    %cst_9 = arith.constant 9.99999996E-13 : f32
    %27 = vector.broadcast %cst_9 : f32 to vector<16x1xf32>
    %28 = arith.addf %26, %27 : vector<16x1xf32>
    %29 = math.rsqrt %28 : vector<16x1xf32>
    %30 = vector.broadcast %29 : vector<16x1xf32> to vector<16x128xf32>
    %31 = arith.mulf %21, %30 : vector<16x128xf32>
    %32 = vector.broadcast %7 : vector<1x128xf32> to vector<16x128xf32>
    %33 = arith.mulf %31, %32 : vector<16x128xf32>
    %34 = vector.broadcast %8 : vector<1x128xf32> to vector<16x128xf32>
    %35 = arith.addf %33, %34 : vector<16x128xf32>
    %c0_10 = arith.constant 0 : index
    %c0_11 = arith.constant 0 : index
    %36 = vector.load %arg4[%c0_10, %c0_11] : memref<16x128xf32, #tpu.memory_space<vmem>>, vector<16x128xf32>
    tpu.vector_store %arg4[%c0_10, %c0_11], %35 {strides = array<i32>} : memref<16x128xf32, #tpu.memory_space<vmem>>, vector<16x128xf32>,
    return
  }
  func.func @transform_0(%arg0: i32) -> (i32, i32) {
    %c0_i32 = arith.constant 0 : i32
    %c0_i32_0 = arith.constant 0 : i32
    return %arg0, %c0_i32 : i32, i32
  }
  func.func @transform_1(%arg0: i32) -> (i32, i32) {
    %c0_i32 = arith.constant 0 : i32
    %c0_i32_0 = arith.constant 0 : i32
    %c0_i32_1 = arith.constant 0 : i32
    return %c0_i32, %c0_i32_0 : i32, i32
  }
  func.func @transform_2(%arg0: i32) -> (i32, i32) {
    %c0_i32 = arith.constant 0 : i32
    %c0_i32_0 = arith.constant 0 : i32
    %c0_i32_1 = arith.constant 0 : i32
    return %c0_i32, %c0_i32_0 : i32, i32
  }
  func.func @transform_3(%arg0: i32) -> (i32, i32) {
    %c0_i32 = arith.constant 0 : i32
    %c0_i32_0 = arith.constant 0 : i32
    return %arg0, %c0_i32 : i32, i32
  }
}

</mosaic_0001>

<llo_original>
// kernel: tpu_custom_call.1
$region0: #{tpu_custom_call.1}
  #allocation0 [shape = 'u32[]', space=smem, size = 0x4, offset = 0x4, fixed_abs, tag = 'smem constant byte address 0x4 - core index']
  #allocation1 [shape = 'u32[72,128]{1,0:T(1,128)}', space=vmem, size = 0x9000, scoped, tag = 'internal scratch']
  %s0 = inlined_call_operand.hbm [shape: f32[16,128], index: 0, kind: input, shape index: {}]
  %s1 = inlined_call_operand.hbm [shape: f32[128,128], index: 1, kind: input, shape index: {}]
  %s2 = inlined_call_operand.hbm [shape: f32[3,128], index: 2, kind: input, shape index: {}]
  %s3 = inlined_call_operand.hbm [shape: f32[16,128], index: 3, kind: output, shape index: {}]
  %s4 = sld [smem:[#allocation0]]
  $region34: #{tpu_custom_call.1} parent=0
    _
  %s6 = ssub.s32 1, %s4
  %s7 = scalar_select 0, %s6, %s4
  $region1: #{tpu_custom_call.1} parent=0
    #allocation2 [shape = 'u8[8192]{0}', space=vmem, size = 0x2000, scoped, tag = 'input window, operand 0, single buffered']
    #allocation3 [shape = 's32[1]{0}', space=sflag, size = 0x4, scoped, tag = 'scoped memory for tpu_custom_call.1']
    #allocation4 [shape = 's32[1]{0}', space=sflag, size = 0x4, scoped, tag = 'scoped memory for tpu_custom_call.1']
    #allocation5 [shape = 'u8[65536]{0}', space=vmem, size = 0x10000, scoped, tag = 'input window, operand 1, single buffered']
    #allocation6 [shape = 's32[1]{0}', space=sflag, size = 0x4, scoped, tag = 'scoped memory for tpu_custom_call.1']
    #allocation7 [shape = 'u8[2048]{0}', space=vmem, size = 0x800, scoped, tag = 'input window, operand 2, single buffered']
    #allocation8 [shape = 'u8[8192]{0}', space=vmem, size = 0x2000, scoped, tag = 'output window, operand 0, single buffered']
    %8 = vsyncpa [#allocation3], 0
    %9 = vsyncpa [#allocation6], 0
    %10 = vsyncpa [#allocation4], 0
    // Predicated region
    $region2: #{tpu_custom_call.1} parent=1 // pred_check
      _
    $region3: #{tpu_custom_call.1} parent=1 // pred_check_branch
      %12 = sbr.rel (0) target = $region5
    $region4: #{tpu_custom_call.1} parent=1 // pred_region
      %14 = vsyncadd [#allocation3], 0
      %s15 = sshll.u32 %s0, 4
      %s16 = int_to_ptr.hbm [resolvable:$true] %s15
      %s17 = sshll.u32 [#allocation2], 4
      %s18 = int_to_ptr.vmem [resolvable:$true] %s17
      %23 = dma.hbm_to_vmem [thread:$0]  %s16, 256, %s18, [#allocation3], 128, 128, 8
    $region5: #{tpu_custom_call.1} parent=1 // pred_fallthru
      _
    // Predicated region
    $region6: #{tpu_custom_call.1} parent=1 // pred_check
      _
    $region7: #{tpu_custom_call.1} parent=1 // pred_check_branch
      %25 = sbr.rel (0) target = $region9
    $region8: #{tpu_custom_call.1} parent=1 // pred_region
      %27 = vsyncadd [#allocation6], 0
      %s28 = sshll.u32 %s1, 4
      %s29 = int_to_ptr.hbm [resolvable:$true] %s28
      %s30 = sshll.u32 [#allocation5], 4
      %s31 = int_to_ptr.vmem [resolvable:$true] %s30
      %36 = dma.hbm_to_vmem [thread:$0]  %s29, 2048, %s31, [#allocation6], 128, 128, 8
    $region9: #{tpu_custom_call.1} parent=1 // pred_fallthru
      _
    // Predicated region
    $region10: #{tpu_custom_call.1} parent=1 // pred_check
      _
    $region11: #{tpu_custom_call.1} parent=1 // pred_check_branch
      %38 = sbr.rel (0) target = $region13
    $region12: #{tpu_custom_call.1} parent=1 // pred_region
      %40 = vsyncadd [#allocation6], 0
      %s42 = sshll.u32 %s2, 4
      %s43 = int_to_ptr.hbm [resolvable:$true] %s42
      %s44 = sshll.u32 [#allocation7], 4
      %s45 = int_to_ptr.vmem [resolvable:$true] %s44
      %47 = dma.hbm_to_vmem [thread:$0]  %s43, 64, %s45, [#allocation6]
    $region13: #{tpu_custom_call.1} parent=1 // pred_fallthru
      _
    // Predicated region
    $region14: #{tpu_custom_call.1} parent=1 // pred_check
      _
    $region15: #{tpu_custom_call.1} parent=1 // pred_check_branch
      %49 = sbr.rel (0) target = $region17
    $region16: #{tpu_custom_call.1} parent=1 // pred_region
      %51 = dma.done [#allocation3], 256
    $region17: #{tpu_custom_call.1} parent=1 // pred_fallthru
      _
    // Predicated region
    $region18: #{tpu_custom_call.1} parent=1 // pred_check
      _
    $region19: #{tpu_custom_call.1} parent=1 // pred_check_branch
      %53 = sbr.rel (0) target = $region21
    $region20: #{tpu_custom_call.1} parent=1 // pred_region
      %55 = dma.done [#allocation6], 2048
    $region21: #{tpu_custom_call.1} parent=1 // pred_fallthru
      _
    // Predicated region
    $region22: #{tpu_custom_call.1} parent=1 // pred_check
      _
    $region23: #{tpu_custom_call.1} parent=1 // pred_check_branch
      %57 = sbr.rel (0) target = $region25
    $region24: #{tpu_custom_call.1} parent=1 // pred_region
      %59 = dma.done [#allocation6], 64
    $region25: #{tpu_custom_call.1} parent=1 // pred_fallthru
      _
    %v60 = vld [vmem:[#allocation2] sm:$0xff]
    %v61 = vld [vmem:[#allocation2 + $0x8] sm:$0xff]
    %v62 = vld [vmem:[#allocation5] sm:$0xff]
    %v63 = vld [vmem:[#allocation5 + $0x8] sm:$0xff]
    %v64 = vld [vmem:[#allocation5 + $0x10] sm:$0xff]
    %v65 = vld [vmem:[#allocation5 + $0x18] sm:$0xff]
    %v66 = vld [vmem:[#allocation5 + $0x20] sm:$0xff]
    %v67 = vld [vmem:[#allocation5 + $0x28] sm:$0xff]
    %v68 = vld [vmem:[#allocation5 + $0x30] sm:$0xff]
    %v69 = vld [vmem:[#allocation5 + $0x38] sm:$0xff]
    %v70 = vld [vmem:[#allocation5 + $0x40] sm:$0xff]
    %v71 = vld [vmem:[#allocation5 + $0x48] sm:$0xff]
    %v72 = vld [vmem:[#allocation5 + $0x50] sm:$0xff]
    %v73 = vld [vmem:[#allocation5 + $0x58] sm:$0xff]
    %v74 = vld [vmem:[#allocation5 + $0x60] sm:$0xff]
    %v75 = vld [vmem:[#allocation5 + $0x68] sm:$0xff]
    %v76 = vld [vmem:[#allocation5 + $0x70] sm:$0xff]
    %v77 = vld [vmem:[#allocation5 + $0x78] sm:$0xff]
    %v78 = vld [vmem:[#allocation7] sm:$0x7]
    %v79 = vperm.slane %v78, 0
    %80 = vmatpush.msra.mxu0 %v77
    %81 = vmatpush.msra.mxu0 %v76
    %82 = vmatpush.msra.mxu0 %v75
    %83 = vmatpush.msra.mxu0 %v74
    %84 = vmatpush.msra.mxu0 %v73
    %85 = vmatpush.msra.mxu0 %v72
    %86 = vmatpush.msra.mxu0 %v71
    %87 = vmatpush.msra.mxu0 %v70
    %88 = vmatpush.msra.mxu0 %v69
    %89 = vmatpush.msra.mxu0 %v68
    %90 = vmatpush.msra.mxu0 %v67
    %91 = vmatpush.msra.mxu0 %v66
    %92 = vmatpush.msra.mxu0 %v65
    %93 = vmatpush.msra.mxu0 %v64
    %94 = vmatpush.msra.mxu0 %v63
    %95 = vmatpush.msra.mxu0 %v62
    %96 = vmatmul.f32.gmra.mxu0 %v60
    %v97 = vpop.f32.mrf.mxu0
    %v98 = vadd.f32 %v79, %v97
    %99 = vmatmul.f32.gmra.mxu0 %v61
    %v100 = vpop.f32.mrf.mxu0
    %v101 = vadd.f32 %v79, %v100
    %102 = vdwg.mxu0
    %v103 = vlaneseq
    %v104 = vand.u32 %v103, 127
    %vm105 = vcmp.lt.s32.totalorder %v104, 64
    %v106 = vsel %vm105, 1, 0
    %v107 = vcvt.s32.f32 %v106
    %v108 = vmul.f32 %v98, %v107
    %v109 = vmul.f32 %v101, %v107
    %110 = vadd.xlane.f32.xlu0 %v108
    %v111 = vpop.xlane.xlu0 %110
    %112 = vadd.xlane.f32.xlu0 %v109
    %v113 = vpop.xlane.xlu0 %112
    %v114 = vmul.f32 %v111, 0.015625
    %v115 = vmul.f32 %v113, 0.015625
    %v116 = vsub.f32 %v98, %v114
    %v117 = vsub.f32 %v101, %v115
    %v118 = vmul.f32 %v116, %v107
    %v119 = vmul.f32 %v117, %v107
    %v120 = vmul.f32 %v118, %v118
    %v121 = vmul.f32 %v119, %v119
    %122 = vadd.xlane.f32.xlu0 %v120
    %v123 = vpop.xlane.xlu0 %122
    %124 = vadd.xlane.f32.xlu0 %v121
    %v125 = vpop.xlane.xlu0 %124
    %v126 = vmul.f32 %v123, 0.015625
    %v127 = vmul.f32 %v125, 0.015625
    %v128 = vadd.f32 %v126, 1e-12
    %v129 = vadd.f32 %v127, 1e-12
    %v130 = vrsqrt.pop %v128
    %v131 = vmul.f32 %v130, %v128
    %v132 = vmul.f32 %v131, %v130
    %v133 = vmul.f32 0.5, %v132
    %v134 = vsub.f32 1.5, %v133
    %v135 = vmul.f32 %v130, %v134
    %vm136 = vweird.f32 %v128
    %vm137 = vweird.f32 %v130
    %vm138 = vmor %vm136, %vm137
    %v139 = vsel %vm138, %v130, %v135
    %v140 = vrsqrt.pop %v129
    %v141 = vmul.f32 %v140, %v129
    %v142 = vmul.f32 %v141, %v140
    %v143 = vmul.f32 0.5, %v142
    %v144 = vsub.f32 1.5, %v143
    %v145 = vmul.f32 %v140, %v144
    %vm146 = vweird.f32 %v129
    %vm147 = vweird.f32 %v140
    %vm148 = vmor %vm146, %vm147
    %v149 = vsel %vm148, %v140, %v145
    %v150 = vmul.f32 %v118, %v139
    %v151 = vmul.f32 %v119, %v149
    %v152 = vperm.slane %v78, 1
    %v153 = vmul.f32 %v150, %v152
    %v154 = vmul.f32 %v151, %v152
    %v155 = vperm.slane %v78, 2
    %v156 = vadd.f32 %v153, %v155
    %v157 = vadd.f32 %v154, %v155
    %158 = vst [vmem:[#allocation8] sm:$0xff] %v156
    %159 = vst [vmem:[#allocation8 + $0x8] sm:$0xff] %v157
    // Predicated region
    $region26: #{tpu_custom_call.1} parent=1 // pred_check
      _
    $region27: #{tpu_custom_call.1} parent=1 // pred_check_branch
      %161 = sbr.rel (0) target = $region29
    $region28: #{tpu_custom_call.1} parent=1 // pred_region
      %163 = vsyncadd [#allocation4], 0
      %s164 = sshll.u32 [#allocation8], 4
      %s165 = int_to_ptr.vmem [resolvable:$true] %s164
      %s166 = sshll.u32 %s3, 4
      %s167 = int_to_ptr.hbm [resolvable:$true] %s166
      %172 = dma.vmem_to_hbm [thread:$0]  %s165, 256, %s167, [#allocation4], 128, 128, 8
    $region29: #{tpu_custom_call.1} parent=1 // pred_fallthru
      _
    // Predicated region
    $region30: #{tpu_custom_call.1} parent=1 // pred_check
      _
    $region31: #{tpu_custom_call.1} parent=1 // pred_check_branch
      %174 = sbr.rel (0) target = $region33
    $region32: #{tpu_custom_call.1} parent=1 // pred_region
      %176 = dma.done [#allocation4], 256
    $region33: #{tpu_custom_call.1} parent=1 // pred_fallthru
      _
    %177 = vsyncpa [#allocation3], 1
    %178 = vsyncpa [#allocation6], 1
    %179 = vsyncpa [#allocation4], 1

</llo_original>
